<compile_context>
chip_gen: v7x
topology: tpu7x:2x2x1
jax: 0.10.0
libtpu: 0.0.40
codegen_flags: <defaults>
</compile_context>

<pallas_src>
import functools
import math

import jax
import jax.numpy as jnp
from jax.experimental import pallas as pl
from jax.experimental.pallas import tpu as pltpu

_NEG_BIG = -1e30  # finite "minus infinity" (avoids inf-inf NaNs)


def _round_up(x, m):
    return -(-x // m) * m


# ----------------------------------------------------------------------------
# Fused multi-output linear:  y_i = x @ W_i + b_i
#   grid = (M/tm,); W_i and b_i are VMEM-resident (constant index_map); x is
#   read once per tile; bf16 MXU operands with f32 accumulation.
# ----------------------------------------------------------------------------
def _linear_kernel(x_ref, *refs, n_out):
    w_refs = refs[:n_out]
    b_refs = refs[n_out:2 * n_out]
    o_refs = refs[2 * n_out:]
    xb = x_ref[...].astype(jnp.bfloat16)
    for w_ref, b_ref, o_ref in zip(w_refs, b_refs, o_refs):
        acc = jnp.dot(xb, w_ref[...], preferred_element_type=jnp.float32)
        o_ref[...] = (acc + b_ref[...].astype(jnp.float32)).astype(o_ref.dtype)


def pallas_multi_linear(x2d, weights, biases, *, out_dtype=jnp.float32, tm=512):
    """Compute [x2d @ W_i + b_i for i].  Weights are expected pre-cast (bf16)."""
    n_out = len(weights)
    M, K = x2d.shape
    N = weights[0].shape[1]
    for w in weights:
        assert w.shape == (K, N)
    biases = [b.reshape(1, N) for b in biases]

    tm_eff = min(tm, _round_up(M, 8))
    Mp = _round_up(M, tm_eff)
    if Mp != M:
        x2d = jnp.pad(x2d, ((0, Mp - M), (0, 0)))

    grid = (Mp // tm_eff,)
    x_spec = pl.BlockSpec((tm_eff, K), lambda i: (i, 0))
    w_spec = pl.BlockSpec((K, N), lambda i: (0, 0))    # resident weight
    b_spec = pl.BlockSpec((1, N), lambda i: (0, 0))    # resident bias
    o_spec = pl.BlockSpec((tm_eff, N), lambda i: (i, 0))

    out_bytes = jnp.dtype(out_dtype).itemsize
    outs = pl.pallas_call(
        functools.partial(_linear_kernel, n_out=n_out),
        out_shape=tuple(jax.ShapeDtypeStruct((Mp, N), out_dtype)
                        for _ in range(n_out)),
        grid=grid,
        in_specs=[x_spec] + [w_spec] * n_out + [b_spec] * n_out,
        out_specs=tuple(o_spec for _ in range(n_out)),
        compiler_params=pltpu.CompilerParams(
            dimension_semantics=("parallel",)),
        cost_estimate=pl.CostEstimate(
            flops=2 * Mp * K * N * n_out,
            transcendentals=0,
            bytes_accessed=(Mp * K * x2d.dtype.itemsize
                            + sum(int(w.size) * w.dtype.itemsize for w in weights)
                            + n_out * N * 4
                            + n_out * Mp * N * out_bytes)),
    )(x2d, *weights, *biases)

    if not isinstance(outs, (list, tuple)):
        outs = (outs,)
    if Mp != M:
        outs = [o[:M] for o in outs]
    return list(outs)


# ----------------------------------------------------------------------------
# Sparse windowed block attention.
#   grid = (B, num_super_blocks).  Per step: manual double-buffered DMA of one
#   contiguous K/V slab of (NQ + 2W) blocks, then NQ query blocks computed with
#   a full-window (2W+1) softmax each.
#   score[b, s, w] = sum_c q[b, s, c] * k_block_w[b, s, c] * scale
# ----------------------------------------------------------------------------
def _sparse_attn_kernel(q_ref, k_hbm, v_hbm, o_ref, k_buf, v_buf, sem, *,
                        scale, W, NQ, nb):
    b = pl.program_id(0)          # batch element
    g = pl.program_id(1)          # query super-block
    n_g = pl.num_programs(1)
    S = NQ + 2 * W                # slab size (blocks)
    Wn = 2 * W + 1                # window size (blocks)
    slot = g % 2

    def start_slab(gg, sl):
        pltpu.make_async_copy(k_hbm.at[b, pl.ds(gg * NQ, S)], k_buf.at[sl],
                              sem.at[0, sl]).start()
        pltpu.make_async_copy(v_hbm.at[b, pl.ds(gg * NQ, S)], v_buf.at[sl],
                              sem.at[1, sl]).start()

    # Prime the pipeline at the start of each batch element (g == 0).
    @pl.when(g == 0)
    def _():
        start_slab(g, slot)

    # Wait for the current slab.
    pltpu.make_async_copy(k_hbm.at[b, pl.ds(g * NQ, S)], k_buf.at[slot],
                          sem.at[0, slot]).wait()
    pltpu.make_async_copy(v_hbm.at[b, pl.ds(g * NQ, S)], v_buf.at[slot],
                          sem.at[1, slot]).wait()

    # Prefetch the next slab (stays within the same batch element).
    @pl.when(g + 1 < n_g)
    def _():
        start_slab(g + 1, 1 - slot)

    k_slab = k_buf[slot]          # (S, bs, C) bf16
    v_slab = v_buf[slot]

    w_iota = jax.lax.broadcasted_iota(jnp.int32, (Wn, 1, 1), 0)   # window offsets

    for qi in range(NQ):
        ib = g * NQ + qi                           # original query-block index
        qv = q_ref[qi].astype(jnp.float32)         # (bs, C)
        k_win = k_slab[qi:qi + Wn]                 # (Wn, bs, C)
        v_win = v_slab[qi:qi + Wn]

        # Per-position scores over the whole window at once.
        s = jnp.sum(qv[None, :, :] * k_win, axis=-1, keepdims=True) * scale
        kb_idx = w_iota + (ib - W)                 # original key-block indices
        valid = jnp.logical_and(kb_idx >= 0, kb_idx < nb)
        s = jnp.where(valid, s, _NEG_BIG)          # (Wn, bs, 1)

        m = jnp.max(s, axis=0, keepdims=True)      # (1, bs, 1)
        p = jnp.exp(s - m)                         # invalid -> exp(-huge) == 0
        l = jnp.sum(p, axis=0, keepdims=True)      # (1, bs, 1), >= 1
        o = jnp.sum(p * v_win, axis=0)             # (bs, C) f32
        o = o * pl.reciprocal(l[0], approx=True)
        o_ref[qi] = o.astype(o_ref.dtype)


def sparse_block_attention(q, k, v, seq_len, *, block_size, window_size, scale,
                           q_blocks_per_step=8, out_dtype=jnp.bfloat16):
    """Windowed block attention.  Returns the block-padded output
    (B, nb_padded * block_size, C); caller slices back to seq_len after the
    (row-independent) projection to avoid an extra pad/slice round trip."""
    B, N, C = q.shape
    assert N == seq_len
    bs = block_size
    nb = pl.cdiv(N, bs)                       # real blocks
    W = max(0, min(window_size, nb - 1))      # effective half-window
    NQ = min(q_blocks_per_step, nb)           # query blocks per grid step
    nb_q = _round_up(nb, NQ)                  # padded query-block count
    Np = nb_q * bs
    if Np != N:
        padn = ((0, 0), (0, Np - N), (0, 0))
        q = jnp.pad(q, padn)
        k = jnp.pad(k, padn)
        v = jnp.pad(v, padn)
    qb = q.reshape(B, nb_q, bs, C)
    kb = k.reshape(B, nb_q, bs, C)
    vb = v.reshape(B, nb_q, bs, C)
    # Pad the K/V block axis by W zero blocks on each side so every query
    # super-block reads one contiguous slab of NQ + 2W blocks.
    kx = jnp.pad(kb, ((0, 0), (W, W), (0, 0), (0, 0)))
    vx = jnp.pad(vb, ((0, 0), (W, W), (0, 0), (0, 0)))

    n_g = nb_q // NQ
    S = NQ + 2 * W
    Wn = 2 * W + 1

    kernel = functools.partial(_sparse_attn_kernel,
                               scale=scale, W=W, NQ=NQ, nb=nb)

    kv_bytes = kx.dtype.itemsize
    out_bytes = jnp.dtype(out_dtype).itemsize
    # VMEM budget: double-buffered K/V slabs + pipelined q/out blocks + temps.
    est = (2 * 2 * S * bs * C * kv_bytes
           + 4 * NQ * bs * C * (q.dtype.itemsize + out_bytes)
           + 6 * Wn * bs * C * 4)
    cp = dict(dimension_semantics=("parallel", "arbitrary"))
    if est > 30 * 2**20:
        cp["vmem_limit_bytes"] = int(min(est * 2, 100 * 2**20))

    out = pl.pallas_call(
        kernel,
        out_shape=jax.ShapeDtypeStruct((B, nb_q, bs, C), out_dtype),
        grid=(B, n_g),
        in_specs=[
            pl.BlockSpec((None, NQ, bs, C), lambda b, g: (b, g, 0, 0)),
            pl.BlockSpec(memory_space=pl.ANY),     # K in HBM (manual DMA)
            pl.BlockSpec(memory_space=pl.ANY),     # V in HBM (manual DMA)
        ],
        out_specs=pl.BlockSpec((None, NQ, bs, C), lambda b, g: (b, g, 0, 0)),
        scratch_shapes=[
            pltpu.VMEM((2, S, bs, C), kx.dtype),   # K slab double buffer
            pltpu.VMEM((2, S, bs, C), vx.dtype),   # V slab double buffer
            pltpu.SemaphoreType.DMA((2, 2)),
        ],
        compiler_params=pltpu.CompilerParams(**cp),
        cost_estimate=pl.CostEstimate(
            flops=4 * B * nb_q * Wn * bs * C,
            transcendentals=B * nb_q * Wn * bs,
            bytes_accessed=(B * nb_q * bs * C * (q.dtype.itemsize + out_bytes)
                            + 2 * B * n_g * S * bs * C * kv_bytes)),
    )(qb, kx, vx)

    return out.reshape(B, Np, C)


# ----------------------------------------------------------------------------
# SparseAttention module (Pallas-backed forward)
# ----------------------------------------------------------------------------
class SparseAttentionPallas:
    def __init__(self, dim, num_heads=8, window_size=64, block_size=32,
                 key=None):
        assert dim % num_heads == 0
        if key is None:
            key = jax.random.PRNGKey(0)
        self.dim = dim
        self.heads = num_heads
        self.block_size = block_size
        self.window_size = window_size
        self.scale = (dim // num_heads) ** (-0.5)

        k1, k2, k3, k4 = jax.random.split(key, 4)
        s = 1.0 / math.sqrt(dim)
        # f32 master weights, (in_features, out_features) layout.
        self.qkv_w = jax.random.uniform(k1, (dim, dim * 3), jnp.float32, -s, s)
        self.qkv_b = jax.random.uniform(k2, (dim * 3,), jnp.float32, -s, s)
        self.proj_w = jax.random.uniform(k3, (dim, dim), jnp.float32, -s, s)
        self.proj_b = jax.random.uniform(k4, (dim,), jnp.float32, -s, s)

        # Pre-permute the fused qkv columns so one fused kernel call emits
        # q/k/v directly in 'b n (h d)' layout (== rearrange + chunk(3) +
        # rearrange back): qkv channel head*3*dh + {0, dh, 2*dh} + j maps to
        # q/k/v channel head*dh + j.  Pre-cast weights to bf16 once.
        dh = dim // num_heads
        base = jnp.arange(num_heads, dtype=jnp.int32)[:, None] * (3 * dh)
        off = jnp.arange(dh, dtype=jnp.int32)[None, :]
        q_cols = (base + off).reshape(-1)
        k_cols = (base + dh + off).reshape(-1)
        v_cols = (base + 2 * dh + off).reshape(-1)
        self.wq = self.qkv_w[:, q_cols].astype(jnp.bfloat16)
        self.wk = self.qkv_w[:, k_cols].astype(jnp.bfloat16)
        self.wv = self.qkv_w[:, v_cols].astype(jnp.bfloat16)
        self.bq = self.qkv_b[q_cols]
        self.bk = self.qkv_b[k_cols]
        self.bv = self.qkv_b[v_cols]
        self.proj_w_bf16 = self.proj_w.astype(jnp.bfloat16)
        # TODO(synk): nn.Conv1d `downsample` (dim > 256 only, unused in forward) omitted.

    def __call__(self, x):
        B, N, C = x.shape
        x2d = x.reshape(B * N, C)

        # Fused q/k/v projection: x read once, q/k/v emitted as bf16.
        q, k, v = pallas_multi_linear(
            x2d, [self.wq, self.wk, self.wv], [self.bq, self.bk, self.bv],
            out_dtype=jnp.bfloat16)
        q = q.reshape(B, N, C)
        k = k.reshape(B, N, C)
        v = v.reshape(B, N, C)

        out = sparse_block_attention(
            q, k, v, N,
            block_size=self.block_size,
            window_size=self.window_size,
            scale=self.scale)

        # Output head split/merge is an identity permutation; run the final
        # projection on the block-padded rows and slice once at the end.
        Np = out.shape[1]
        y = pallas_multi_linear(out.reshape(B * Np, C),
                                [self.proj_w_bf16], [self.proj_b],
                                out_dtype=jnp.float32)[0]
        return y.reshape(B, Np, C)[:, :N]


# ----------------------------------------------------------------------------
# Pure-JAX f32 reference (mirrors the PyTorch forward).
# ----------------------------------------------------------------------------
def _reference_forward(mod, x):
    B, N, C = x.shape
    h, dh = mod.heads, C // mod.heads
    qkv = x @ mod.qkv_w + mod.qkv_b
    qkv = qkv.reshape(B, N, h, 3, dh)
    q = qkv[:, :, :, 0, :].reshape(B, N, C)
    k = qkv[:, :, :, 1, :].reshape(B, N, C)
    v = qkv[:, :, :, 2, :].reshape(B, N, C)

    bs = mod.block_size
    nb = -(-N // bs)
    pad = nb * bs - N
    if pad > 0:
        q = jnp.pad(q, ((0, 0), (0, pad), (0, 0)))
        k = jnp.pad(k, ((0, 0), (0, pad), (0, 0)))
        v = jnp.pad(v, ((0, 0), (0, pad), (0, 0)))
    qb = q.reshape(B, nb, bs, C)
    kb = k.reshape(B, nb, bs, C)
    vb = v.reshape(B, nb, bs, C)

    outs = []
    for i in range(nb):
        start = max(0, i - mod.window_size)
        end = min(nb, i + mod.window_size + 1)
        qi = qb[:, i]
        kw = kb[:, start:end]
        vw = vb[:, start:end]
        attn = jnp.einsum('bsc,bwsc->bsw', qi, kw) * mod.scale
        attn = jax.nn.softmax(attn, axis=-1)
        outs.append(jnp.einsum('bsw,bwsc->bsc', attn, vw))
    out = jnp.concatenate(outs, axis=1)
    if pad > 0:
        out = out[:, :N]
    return out @ mod.proj_w + mod.proj_b


if __name__ == "__main__":
    key = jax.random.PRNGKey(0)
    kx, kp, kt1, kt2 = jax.random.split(key, 4)

    # N=100, block_size=8 -> 13 real blocks: exercises sequence padding,
    # query super-block padding (NQ=8 -> 16 blocks), edge-window masking and
    # the double-buffered slab prefetch (2 super-blocks per batch element).
    B, N, dim = 2, 100, 32
    x = jax.random.normal(kx, (B, N, dim), jnp.float32)

    mod = SparseAttentionPallas(dim=dim, num_heads=4, window_size=2,
                                block_size=8, key=kp)
    out = jax.block_until_ready(mod(x))
    ref = _reference_forward(mod, x)
    assert out.shape == (B, N, dim)
    # bf16 q/k/v + bf16 MXU operands + approx reciprocal -> loose tolerance.
    assert jnp.allclose(out, ref, atol=5e-2, rtol=5e-2), \
        float(jnp.max(jnp.abs(out - ref)))

    # Standalone check of the multi-M-tile / padded-M path of the linear kernel.
    xt = jax.random.normal(kt1, (200, 160), jnp.float32)
    wt = (jax.random.normal(kt2, (160, 96), jnp.float32) /
          math.sqrt(160.0)).astype(jnp.bfloat16)
    bt = jnp.zeros((96,), jnp.float32)
    yt = jax.block_until_ready(
        pallas_multi_linear(xt, [wt], [bt], out_dtype=jnp.float32, tm=64)[0])
    yref = (xt.astype(jnp.bfloat16).astype(jnp.float32)
            @ wt.astype(jnp.float32) + bt)
    assert jnp.allclose(yt, yref, atol=2e-2, rtol=2e-2), \
        float(jnp.max(jnp.abs(yt - yref)))

    print("KERNEL_OK")
</pallas_src>

<mosaic_0001>
module attributes {stable_mosaic.version = 11 : i64} {
  func.func @_linear_kernel(%arg0: i32, %arg1: memref<200x32xf32, #tpu.memory_space<vmem>>, %arg2: memref<32x32xbf16, #tpu.memory_space<vmem>>, %arg3: memref<32x32xbf16, #tpu.memory_space<vmem>>, %arg4: memref<32x32xbf16, #tpu.memory_space<vmem>>, %arg5: memref<1x32xf32, #tpu.memory_space<vmem>>, %arg6: memref<1x32xf32, #tpu.memory_space<vmem>>, %arg7: memref<1x32xf32, #tpu.memory_space<vmem>>, %arg8: memref<200x32xbf16, #tpu.memory_space<vmem>>, %arg9: memref<200x32xbf16, #tpu.memory_space<vmem>>, %arg10: memref<200x32xbf16, #tpu.memory_space<vmem>>) attributes {dimension_semantics = [#tpu.dimension_semantics<parallel>], iteration_bounds = array<i64: 1>, scalar_prefetch = 0 : i64, scratch_operands = 0 : i64, tpu.core_type = #tpu.core_type<tc>, window_params = [{transform_indices = @transform_0, window_bounds = array<i64: 200, 32>}, {pipeline_mode = #tpu.pipeline_mode<synchronous>, transform_indices = @transform_1, window_bounds = array<i64: 32, 32>}, {pipeline_mode = #tpu.pipeline_mode<synchronous>, transform_indices = @transform_2, window_bounds = array<i64: 32, 32>}, {pipeline_mode = #tpu.pipeline_mode<synchronous>, transform_indices = @transform_3, window_bounds = array<i64: 32, 32>}, {pipeline_mode = #tpu.pipeline_mode<synchronous>, transform_indices = @transform_4, window_bounds = array<i64: 1, 32>}, {pipeline_mode = #tpu.pipeline_mode<synchronous>, transform_indices = @transform_5, window_bounds = array<i64: 1, 32>}, {pipeline_mode = #tpu.pipeline_mode<synchronous>, transform_indices = @transform_6, window_bounds = array<i64: 1, 32>}, {transform_indices = @transform_7, window_bounds = array<i64: 200, 32>}, {transform_indices = @transform_8, window_bounds = array<i64: 200, 32>}, {transform_indices = @transform_9, window_bounds = array<i64: 200, 32>}]} {
    %c0 = arith.constant 0 : index
    %c0_0 = arith.constant 0 : index
    %0 = vector.load %arg1[%c0, %c0_0] : memref<200x32xf32, #tpu.memory_space<vmem>>, vector<200x32xf32>
    %1 = arith.truncf %0 : vector<200x32xf32> to vector<200x32xbf16>
    %c0_1 = arith.constant 0 : index
    %c0_2 = arith.constant 0 : index
    %2 = vector.load %arg2[%c0_1, %c0_2] : memref<32x32xbf16, #tpu.memory_space<vmem>>, vector<32x32xbf16>
    %cst = arith.constant dense<0.000000e+00> : vector<200x32xf32>
    %3 = tpu.matmul %1, %2, %cst {dimension_numbers = #tpu.dot_dimension_numbers<[1], [0], [0], [1], [0, 0, 1, 1], [], []>} : vector<200x32xbf16>, vector<32x32xbf16>, vector<200x32xf32> -> vector<200x32xf32>
    %c0_3 = arith.constant 0 : index
    %c0_4 = arith.constant 0 : index
    %4 = vector.load %arg5[%c0_3, %c0_4] : memref<1x32xf32, #tpu.memory_space<vmem>>, vector<1x32xf32>
    %5 = vector.broadcast %4 : vector<1x32xf32> to vector<200x32xf32>
    %6 = arith.addf %3, %5 : vector<200x32xf32>
    %7 = arith.truncf %6 : vector<200x32xf32> to vector<200x32xbf16>
    %c0_5 = arith.constant 0 : index
    %c0_6 = arith.constant 0 : index
    %8 = vector.load %arg8[%c0_5, %c0_6] : memref<200x32xbf16, #tpu.memory_space<vmem>>, vector<200x32xbf16>
    tpu.vector_store %arg8[%c0_5, %c0_6], %7 {strides = array<i32>} : memref<200x32xbf16, #tpu.memory_space<vmem>>, vector<200x32xbf16>,
    %c0_7 = arith.constant 0 : index
    %c0_8 = arith.constant 0 : index
    %9 = vector.load %arg3[%c0_7, %c0_8] : memref<32x32xbf16, #tpu.memory_space<vmem>>, vector<32x32xbf16>
    %cst_9 = arith.constant dense<0.000000e+00> : vector<200x32xf32>
    %10 = tpu.matmul %1, %9, %cst_9 {dimension_numbers = #tpu.dot_dimension_numbers<[1], [0], [0], [1], [0, 0, 1, 1], [], []>} : vector<200x32xbf16>, vector<32x32xbf16>, vector<200x32xf32> -> vector<200x32xf32>
    %c0_10 = arith.constant 0 : index
    %c0_11 = arith.constant 0 : index
    %11 = vector.load %arg6[%c0_10, %c0_11] : memref<1x32xf32, #tpu.memory_space<vmem>>, vector<1x32xf32>
    %12 = vector.broadcast %11 : vector<1x32xf32> to vector<200x32xf32>
    %13 = arith.addf %10, %12 : vector<200x32xf32>
    %14 = arith.truncf %13 : vector<200x32xf32> to vector<200x32xbf16>
    %c0_12 = arith.constant 0 : index
    %c0_13 = arith.constant 0 : index
    %15 = vector.load %arg9[%c0_12, %c0_13] : memref<200x32xbf16, #tpu.memory_space<vmem>>, vector<200x32xbf16>
    tpu.vector_store %arg9[%c0_12, %c0_13], %14 {strides = array<i32>} : memref<200x32xbf16, #tpu.memory_space<vmem>>, vector<200x32xbf16>,
    %c0_14 = arith.constant 0 : index
    %c0_15 = arith.constant 0 : index
    %16 = vector.load %arg4[%c0_14, %c0_15] : memref<32x32xbf16, #tpu.memory_space<vmem>>, vector<32x32xbf16>
    %cst_16 = arith.constant dense<0.000000e+00> : vector<200x32xf32>
    %17 = tpu.matmul %1, %16, %cst_16 {dimension_numbers = #tpu.dot_dimension_numbers<[1], [0], [0], [1], [0, 0, 1, 1], [], []>} : vector<200x32xbf16>, vector<32x32xbf16>, vector<200x32xf32> -> vector<200x32xf32>
    %c0_17 = arith.constant 0 : index
    %c0_18 = arith.constant 0 : index
    %18 = vector.load %arg7[%c0_17, %c0_18] : memref<1x32xf32, #tpu.memory_space<vmem>>, vector<1x32xf32>
    %19 = vector.broadcast %18 : vector<1x32xf32> to vector<200x32xf32>
    %20 = arith.addf %17, %19 : vector<200x32xf32>
    %21 = arith.truncf %20 : vector<200x32xf32> to vector<200x32xbf16>
    %c0_19 = arith.constant 0 : index
    %c0_20 = arith.constant 0 : index
    %22 = vector.load %arg10[%c0_19, %c0_20] : memref<200x32xbf16, #tpu.memory_space<vmem>>, vector<200x32xbf16>
    tpu.vector_store %arg10[%c0_19, %c0_20], %21 {strides = array<i32>} : memref<200x32xbf16, #tpu.memory_space<vmem>>, vector<200x32xbf16>,
    return
  }
  func.func @transform_0(%arg0: i32) -> (i32, i32) {
    %c0_i32 = arith.constant 0 : i32
    %c0_i32_0 = arith.constant 0 : i32
    return %arg0, %c0_i32 : i32, i32
  }
  func.func @transform_1(%arg0: i32) -> (i32, i32) {
    %c0_i32 = arith.constant 0 : i32
    %c0_i32_0 = arith.constant 0 : i32
    %c0_i32_1 = arith.constant 0 : i32
    return %c0_i32, %c0_i32_0 : i32, i32
  }
  func.func @transform_2(%arg0: i32) -> (i32, i32) {
    %c0_i32 = arith.constant 0 : i32
    %c0_i32_0 = arith.constant 0 : i32
    %c0_i32_1 = arith.constant 0 : i32
    return %c0_i32, %c0_i32_0 : i32, i32
  }
  func.func @transform_3(%arg0: i32) -> (i32, i32) {
    %c0_i32 = arith.constant 0 : i32
    %c0_i32_0 = arith.constant 0 : i32
    %c0_i32_1 = arith.constant 0 : i32
    return %c0_i32, %c0_i32_0 : i32, i32
  }
  func.func @transform_4(%arg0: i32) -> (i32, i32) {
    %c0_i32 = arith.constant 0 : i32
    %c0_i32_0 = arith.constant 0 : i32
    %c0_i32_1 = arith.constant 0 : i32
    return %c0_i32, %c0_i32_0 : i32, i32
  }
  func.func @transform_5(%arg0: i32) -> (i32, i32) {
    %c0_i32 = arith.constant 0 : i32
    %c0_i32_0 = arith.constant 0 : i32
    %c0_i32_1 = arith.constant 0 : i32
    return %c0_i32, %c0_i32_0 : i32, i32
  }
  func.func @transform_6(%arg0: i32) -> (i32, i32) {
    %c0_i32 = arith.constant 0 : i32
    %c0_i32_0 = arith.constant 0 : i32
    %c0_i32_1 = arith.constant 0 : i32
    return %c0_i32, %c0_i32_0 : i32, i32
  }
  func.func @transform_7(%arg0: i32) -> (i32, i32) {
    %c0_i32 = arith.constant 0 : i32
    %c0_i32_0 = arith.constant 0 : i32
    return %arg0, %c0_i32 : i32, i32
  }
  func.func @transform_8(%arg0: i32) -> (i32, i32) {
    %c0_i32 = arith.constant 0 : i32
    %c0_i32_0 = arith.constant 0 : i32
    return %arg0, %c0_i32 : i32, i32
  }
  func.func @transform_9(%arg0: i32) -> (i32, i32) {
    %c0_i32 = arith.constant 0 : i32
    %c0_i32_0 = arith.constant 0 : i32
    return %arg0, %c0_i32 : i32, i32
  }
}

</mosaic_0001>

<llo_original>
// kernel: tpu_custom_call.1
$region0: #{tpu_custom_call.1}
  #allocation0 [shape = 'u32[]', space=smem, size = 0x4, offset = 0x4, fixed_abs, tag = 'smem constant byte address 0x4 - core index']
  #allocation1 [shape = 'u32[144,128]{1,0:T(1,128)}', space=vmem, size = 0x12000, scoped, tag = 'internal scratch']
  %s0 = inlined_call_operand.vmem [shape: f32[200,32], index: 0, kind: input, shape index: {}]
  %s1 = inlined_call_operand.vmem [shape: bf16[32,32], index: 1, kind: input, shape index: {}]
  %s2 = inlined_call_operand.vmem [shape: bf16[32,32], index: 2, kind: input, shape index: {}]
  %s3 = inlined_call_operand.vmem [shape: bf16[32,32], index: 3, kind: input, shape index: {}]
  %s4 = inlined_call_operand.vmem [shape: f32[1,32], index: 4, kind: input, shape index: {}]
  %s5 = inlined_call_operand.vmem [shape: f32[1,32], index: 5, kind: input, shape index: {}]
  %s6 = inlined_call_operand.vmem [shape: f32[1,32], index: 6, kind: input, shape index: {}]
  %s7 = inlined_call_operand.vmem [shape: bf16[200,32], index: 7, kind: output, shape index: {0}]
  %s8 = inlined_call_operand.vmem [shape: bf16[200,32], index: 8, kind: output, shape index: {1}]
  %s9 = inlined_call_operand.vmem [shape: bf16[200,32], index: 9, kind: output, shape index: {2}]
  %10 = xla_tuple %s7, %s8, %s9
  %s11 = sld [smem:[#allocation0]]
  $region54: #{tpu_custom_call.1} parent=0
    _
  %s13 = ssub.s32 1, %s11
  %s14 = scalar_select 0, %s13, %s11
  // Predicated region
  $region2: #{tpu_custom_call.1} parent=0 // pred_check
    _
  $region3: #{tpu_custom_call.1} parent=0 // pred_check_branch
    %16 = sbr.rel (0) target = $region5
  $region4: #{tpu_custom_call.1} parent=0 // pred_region
    _
  $region5: #{tpu_custom_call.1} parent=0 // pred_fallthru
    _
  // Predicated region
  $region6: #{tpu_custom_call.1} parent=0 // pred_check
    _
  $region7: #{tpu_custom_call.1} parent=0 // pred_check_branch
    %18 = sbr.rel (0) target = $region9
  $region8: #{tpu_custom_call.1} parent=0 // pred_region
    _
  $region9: #{tpu_custom_call.1} parent=0 // pred_fallthru
    _
  // Predicated region
  $region10: #{tpu_custom_call.1} parent=0 // pred_check
    _
  $region11: #{tpu_custom_call.1} parent=0 // pred_check_branch
    %20 = sbr.rel (0) target = $region13
  $region12: #{tpu_custom_call.1} parent=0 // pred_region
    _
  $region13: #{tpu_custom_call.1} parent=0 // pred_fallthru
    _
  // Predicated region
  $region14: #{tpu_custom_call.1} parent=0 // pred_check
    _
  $region15: #{tpu_custom_call.1} parent=0 // pred_check_branch
    %22 = sbr.rel (0) target = $region17
  $region16: #{tpu_custom_call.1} parent=0 // pred_region
    _
  $region17: #{tpu_custom_call.1} parent=0 // pred_fallthru
    _
  // Predicated region
  $region18: #{tpu_custom_call.1} parent=0 // pred_check
    _
  $region19: #{tpu_custom_call.1} parent=0 // pred_check_branch
    %24 = sbr.rel (0) target = $region21
  $region20: #{tpu_custom_call.1} parent=0 // pred_region
    _
  $region21: #{tpu_custom_call.1} parent=0 // pred_fallthru
    _
  // Predicated region
  $region22: #{tpu_custom_call.1} parent=0 // pred_check
    _
  $region23: #{tpu_custom_call.1} parent=0 // pred_check_branch
    %26 = sbr.rel (0) target = $region25
  $region24: #{tpu_custom_call.1} parent=0 // pred_region
    _
  $region25: #{tpu_custom_call.1} parent=0 // pred_fallthru
    _
  // Predicated region
  $region26: #{tpu_custom_call.1} parent=0 // pred_check
    _
  $region27: #{tpu_custom_call.1} parent=0 // pred_check_branch
    %28 = sbr.rel (0) target = $region29
  $region28: #{tpu_custom_call.1} parent=0 // pred_region
    _
  $region29: #{tpu_custom_call.1} parent=0 // pred_fallthru
    _
  %v30 = vld [vmem:[%s0] sm:$0xff]
  %v31 = vld [vmem:[%s0 + $0x8] sm:$0xff]
  %v32 = vld [vmem:[%s0 + $0x10] sm:$0xff]
  %v33 = vld [vmem:[%s0 + $0x18] sm:$0xff]
  %v34 = vld [vmem:[%s0 + $0x20] sm:$0xff]
  %v35 = vld [vmem:[%s0 + $0x28] sm:$0xff]
  %v36 = vld [vmem:[%s0 + $0x30] sm:$0xff]
  %v37 = vld [vmem:[%s0 + $0x38] sm:$0xff]
  %v38 = vld [vmem:[%s0 + $0x40] sm:$0xff]
  %v39 = vld [vmem:[%s0 + $0x48] sm:$0xff]
  %v40 = vld [vmem:[%s0 + $0x50] sm:$0xff]
  %v41 = vld [vmem:[%s0 + $0x58] sm:$0xff]
  %v42 = vld [vmem:[%s0 + $0x60] sm:$0xff]
  %v43 = vld [vmem:[%s0 + $0x68] sm:$0xff]
  %v44 = vld [vmem:[%s0 + $0x70] sm:$0xff]
  %v45 = vld [vmem:[%s0 + $0x78] sm:$0xff]
  %v46 = vld [vmem:[%s0 + $0x80] sm:$0xff]
  %v47 = vld [vmem:[%s0 + $0x88] sm:$0xff]
  %v48 = vld [vmem:[%s0 + $0x90] sm:$0xff]
  %v49 = vld [vmem:[%s0 + $0x98] sm:$0xff]
  %v50 = vld [vmem:[%s0 + $0xa0] sm:$0xff]
  %v51 = vld [vmem:[%s0 + $0xa8] sm:$0xff]
  %v52 = vld [vmem:[%s0 + $0xb0] sm:$0xff]
  %v53 = vld [vmem:[%s0 + $0xb8] sm:$0xff]
  %v54 = vld [vmem:[%s0 + $0xc0] sm:$0xff]
  %v55 = vpack.c.bf16 %v31, %v30
  %v56 = vpack.c.bf16 %v33, %v32
  %v57 = vpack.c.bf16 %v35, %v34
  %v58 = vpack.c.bf16 %v37, %v36
  %v59 = vpack.c.bf16 %v39, %v38
  %v60 = vpack.c.bf16 %v41, %v40
  %v61 = vpack.c.bf16 %v43, %v42
  %v62 = vpack.c.bf16 %v45, %v44
  %v63 = vpack.c.bf16 %v47, %v46
  %v64 = vpack.c.bf16 %v49, %v48
  %v65 = vpack.c.bf16 %v51, %v50
  %v66 = vpack.c.bf16 %v53, %v52
  %v67 = vpack.c.bf16 %v54, %v54
  %v68 = vld [vmem:[%s1] sm:$0xf]
  %v69 = vld [vmem:[%s1 + $0x4] sm:$0xf]
  %v70 = vld [vmem:[%s1 + $0x8] sm:$0xf]
  %v71 = vld [vmem:[%s1 + $0xc] sm:$0xf]
  %v72 = vld [vmem:[%s4] sm:$0x1]
  %v74 = vlaneseq
  %v75 = vshrl.u32 %v74, 7
  %v76 = vsub.s32 0, %v75
  %v77 = vrot.slane %v72, %v76
  %v83 = vunpack.c.l.b16 %v68
  %v84 = vunpack.c.l.b16 %v69
  %v85 = vunpack.c.l.b16 %v70
  %v86 = vunpack.c.l.b16 %v71
  %v87 = vpack.c.b16 %v84, %v83
  %v88 = vpack.c.b16 %v86, %v85
  %vm91 = vcmask 261120
  %v93 = vsel %vm91, %v55, 0
  %v96 = vsel %vm91, %v56, 0
  %v99 = vsel %vm91, %v57, 0
  %v102 = vsel %vm91, %v58, 0
  %v105 = vsel %vm91, %v59, 0
  %v108 = vsel %vm91, %v60, 0
  %v111 = vsel %vm91, %v61, 0
  %v114 = vsel %vm91, %v62, 0
  %v117 = vsel %vm91, %v63, 0
  %v120 = vsel %vm91, %v64, 0
  %v123 = vsel %vm91, %v65, 0
  %v126 = vsel %vm91, %v66, 0
  %v129 = vsel %vm91, %v67, 0
  %131 = vmatprep.subr.bf16.mxu0 0
  %132 = vmatpush1.bf16.msra.mxu0 %v87
  %133 = vmatprep.subr.bf16.mxu0 0
  %134 = vmatpush1.bf16.msra.mxu0 %v88
  %135 = vmatprep.subr.bf16.mxu0 0
  %136 = vmatpush1.bf16.msra.mxu0 0
  %137 = vmatprep.subr.bf16.mxu0 0
  %138 = vmatpush1.bf16.msra.mxu0 0
  %139 = vmatprep.subr.bf16.mxu0 0
  %140 = vmatpush1.bf16.msra.mxu0 0
  %141 = vmatprep.subr.bf16.mxu0 0
  %142 = vmatpush1.bf16.msra.mxu0 0
  %143 = vmatprep.subr.bf16.mxu0 0
  %144 = vmatpush1.bf16.msra.mxu0 0
  %145 = vmatprep.subr.bf16.mxu0 0
  %146 = vmatpush1.bf16.msra.mxu0 0
  %147 = vmatprep.subr.bf16.mxu0 0
  %148 = vmatpush1.bf16.msra.mxu0 0
  %149 = vmatprep.subr.bf16.mxu0 0
  %150 = vmatpush1.bf16.msra.mxu0 0
  %151 = vmatprep.subr.bf16.mxu0 0
  %152 = vmatpush1.bf16.msra.mxu0 0
  %153 = vmatprep.subr.bf16.mxu0 0
  %154 = vmatpush1.bf16.msra.mxu0 0
  %155 = vmatprep.subr.bf16.mxu0 0
  %156 = vmatpush1.bf16.msra.mxu0 0
  %157 = vmatprep.subr.bf16.mxu0 0
  %158 = vmatpush1.bf16.msra.mxu0 0
  %159 = vmatprep.subr.bf16.mxu0 0
  %160 = vmatpush1.bf16.msra.mxu0 0
  %161 = vmatprep.subr.bf16.mxu0 0
  %162 = vmatpush1.bf16.msra.mxu0 0
  %163 = vmatprep.mubr.bf16.mxu0 0
  %164 = vmatmul.mubr.bf16.gmra.mrb[0].mxu0 %v93
  %v165 = vpop.f32.mrb[0].mxu0
  %v166 = vadd.f32 %v77, %v165
  %v167 = vpop.f32.mrb[0].mxu0
  %v168 = vpop.f32.mrb[0].mxu0
  %v169 = vadd.f32 %v77, %v168
  %v170 = vpop.f32.mrb[0].mxu0
  %171 = vmatprep.mubr.bf16.mxu0 0
  %172 = vmatmul.mubr.bf16.gmra.mrb[0].mxu0 %v96
  %v173 = vpop.f32.mrb[0].mxu0
  %v174 = vadd.f32 %v77, %v173
  %v175 = vpop.f32.mrb[0].mxu0
  %v176 = vpop.f32.mrb[0].mxu0
  %v177 = vadd.f32 %v77, %v176
  %v178 = vpop.f32.mrb[0].mxu0
  %179 = vmatprep.mubr.bf16.mxu0 0
  %180 = vmatmul.mubr.bf16.gmra.mrb[0].mxu0 %v99
  %v181 = vpop.f32.mrb[0].mxu0
  %v182 = vadd.f32 %v77, %v181
  %v183 = vpop.f32.mrb[0].mxu0
  %v184 = vpop.f32.mrb[0].mxu0
  %v185 = vadd.f32 %v77, %v184
  %v186 = vpop.f32.mrb[0].mxu0
  %187 = vmatprep.mubr.bf16.mxu0 0
  %188 = vmatmul.mubr.bf16.gmra.mrb[0].mxu0 %v102
  %v189 = vpop.f32.mrb[0].mxu0
  %v190 = vadd.f32 %v77, %v189
  %v191 = vpop.f32.mrb[0].mxu0
  %v192 = vpop.f32.mrb[0].mxu0
  %v193 = vadd.f32 %v77, %v192
  %v194 = vpop.f32.mrb[0].mxu0
  %195 = vmatprep.mubr.bf16.mxu0 0
  %196 = vmatmul.mubr.bf16.gmra.mrb[0].mxu0 %v105
  %v197 = vpop.f32.mrb[0].mxu0
  %v198 = vadd.f32 %v77, %v197
  %v199 = vpop.f32.mrb[0].mxu0
  %v200 = vpop.f32.mrb[0].mxu0
  %v201 = vadd.f32 %v77, %v200
  %v202 = vpop.f32.mrb[0].mxu0
  %203 = vmatprep.mubr.bf16.mxu0 0
  %204 = vmatmul.mubr.bf16.gmra.mrb[0].mxu0 %v108
  %v205 = vpop.f32.mrb[0].mxu0
  %v206 = vadd.f32 %v77, %v205
  %v207 = vpop.f32.mrb[0].mxu0
  %v208 = vpop.f32.mrb[0].mxu0
  %v209 = vadd.f32 %v77, %v208
  %v210 = vpop.f32.mrb[0].mxu0
  %211 = vmatprep.mubr.bf16.mxu0 0
  %212 = vmatmul.mubr.bf16.gmra.mrb[0].mxu0 %v111
  %v213 = vpop.f32.mrb[0].mxu0
  %v214 = vadd.f32 %v77, %v213
  %v215 = vpop.f32.mrb[0].mxu0
  %v216 = vpop.f32.mrb[0].mxu0
  %v217 = vadd.f32 %v77, %v216
  %v218 = vpop.f32.mrb[0].mxu0
  %219 = vmatprep.mubr.bf16.mxu0 0
  %220 = vmatmul.mubr.bf16.gmra.mrb[0].mxu0 %v114
  %v221 = vpop.f32.mrb[0].mxu0
  %v222 = vadd.f32 %v77, %v221
  %v223 = vpop.f32.mrb[0].mxu0
  %v224 = vpop.f32.mrb[0].mxu0
  %v225 = vadd.f32 %v77, %v224
  %v226 = vpop.f32.mrb[0].mxu0
  %227 = vmatprep.mubr.bf16.mxu0 0
  %228 = vmatmul.mubr.bf16.gmra.mrb[0].mxu0 %v117
  %v229 = vpop.f32.mrb[0].mxu0
  %v230 = vadd.f32 %v77, %v229
  %v231 = vpop.f32.mrb[0].mxu0
  %v232 = vpop.f32.mrb[0].mxu0
  %v233 = vadd.f32 %v77, %v232
  %v234 = vpop.f32.mrb[0].mxu0
  %235 = vmatprep.mubr.bf16.mxu0 0
  %236 = vmatmul.mubr.bf16.gmra.mrb[0].mxu0 %v120
  %v237 = vpop.f32.mrb[0].mxu0
  %v238 = vadd.f32 %v77, %v237
  %v239 = vpop.f32.mrb[0].mxu0
  %v240 = vpop.f32.mrb[0].mxu0
  %v241 = vadd.f32 %v77, %v240
  %v242 = vpop.f32.mrb[0].mxu0
  %243 = vmatprep.mubr.bf16.mxu0 0
  %244 = vmatmul.mubr.bf16.gmra.mrb[0].mxu0 %v123
  %v245 = vpop.f32.mrb[0].mxu0
  %v246 = vadd.f32 %v77, %v245
  %v247 = vpop.f32.mrb[0].mxu0
  %v248 = vpop.f32.mrb[0].mxu0
  %v249 = vadd.f32 %v77, %v248
  %v250 = vpop.f32.mrb[0].mxu0
  %251 = vmatprep.mubr.bf16.mxu0 0
  %252 = vmatmul.mubr.bf16.gmra.mrb[0].mxu0 %v126
  %v253 = vpop.f32.mrb[0].mxu0
  %v254 = vadd.f32 %v77, %v253
  %v255 = vpop.f32.mrb[0].mxu0
  %v256 = vpop.f32.mrb[0].mxu0
  %v257 = vadd.f32 %v77, %v256
  %v258 = vpop.f32.mrb[0].mxu0
  %259 = vmatprep.mubr.bf16.mxu0 0
  %260 = vmatmul.mubr.bf16.gmra.mrb[0].mxu0 %v129
  %v261 = vpop.f32.mrb[0].mxu0
  %v262 = vadd.f32 %v77, %v261
  %v263 = vpop.f32.mrb[0].mxu0
  %v264 = vpop.f32.mrb[0].mxu0
  %v265 = vpop.f32.mrb[0].mxu0
  %266 = vdwg.mxu0
  %v267 = vpack.c.bf16 %v169, %v166
  %v268 = vpack.c.bf16 %v177, %v174
  %v269 = vpack.c.bf16 %v185, %v182
  %v270 = vpack.c.bf16 %v193, %v190
  %v271 = vpack.c.bf16 %v201, %v198
  %v272 = vpack.c.bf16 %v209, %v206
  %v273 = vpack.c.bf16 %v217, %v214
  %v274 = vpack.c.bf16 %v225, %v222
  %v275 = vpack.c.bf16 %v233, %v230
  %v276 = vpack.c.bf16 %v241, %v238
  %v277 = vpack.c.bf16 %v249, %v246
  %v278 = vpack.c.bf16 %v257, %v254
  %v279 = vpack.c.bf16 %v262, %v262
  %v293 = vunpack.c.l.b16 %v267
  %v294 = vunpack.c.h.b16 %v267
  %v295 = vunpack.c.l.b16 %v268
  %v296 = vunpack.c.h.b16 %v268
  %v297 = vunpack.c.l.b16 %v269
  %v298 = vunpack.c.h.b16 %v269
  %v299 = vunpack.c.l.b16 %v270
  %v300 = vunpack.c.h.b16 %v270
  %v301 = vunpack.c.l.b16 %v271
  %v302 = vunpack.c.h.b16 %v271
  %v303 = vunpack.c.l.b16 %v272
  %v304 = vunpack.c.h.b16 %v272
  %v305 = vunpack.c.l.b16 %v273
  %v306 = vunpack.c.h.b16 %v273
  %v307 = vunpack.c.l.b16 %v274
  %v308 = vunpack.c.h.b16 %v274
  %v309 = vunpack.c.l.b16 %v275
  %v310 = vunpack.c.h.b16 %v275
  %v311 = vunpack.c.l.b16 %v276
  %v312 = vunpack.c.h.b16 %v276
  %v313 = vunpack.c.l.b16 %v277
  %v314 = vunpack.c.h.b16 %v277
  %v315 = vunpack.c.l.b16 %v278
  %v316 = vunpack.c.h.b16 %v278
  %v317 = vunpack.c.l.b16 %v279
  %v318 = vpack.c.b16 %v293, %v293
  %v319 = vpack.c.b16 %v294, %v294
  %v320 = vpack.c.b16 %v295, %v295
  %v321 = vpack.c.b16 %v296, %v296
  %v322 = vpack.c.b16 %v297, %v297
  %v323 = vpack.c.b16 %v298, %v298
  %v324 = vpack.c.b16 %v299, %v299
  %v325 = vpack.c.b16 %v300, %v300
  %v326 = vpack.c.b16 %v301, %v301
  %v327 = vpack.c.b16 %v302, %v302
  %v328 = vpack.c.b16 %v303, %v303
  %v329 = vpack.c.b16 %v304, %v304
  %v330 = vpack.c.b16 %v305, %v305
  %v331 = vpack.c.b16 %v306, %v306
  %v332 = vpack.c.b16 %v307, %v307
  %v333 = vpack.c.b16 %v308, %v308
  %v334 = vpack.c.b16 %v309, %v309
  %v335 = vpack.c.b16 %v310, %v310
  %v336 = vpack.c.b16 %v311, %v311
  %v337 = vpack.c.b16 %v312, %v312
  %v338 = vpack.c.b16 %v313, %v313
  %v339 = vpack.c.b16 %v314, %v314
  %v340 = vpack.c.b16 %v315, %v315
  %v341 = vpack.c.b16 %v316, %v316
  %v342 = vpack.c.b16 %v317, %v317
  %vm368 = vcmask 257024
  %369 = vst.msk [vmem:[%s7] sm:$0xf] %vm368, %v318
  %370 = vst.msk [vmem:[%s7 + $0x4] sm:$0xf] %vm368, %v319
  %371 = vst.msk [vmem:[%s7 + $0x8] sm:$0xf] %vm368, %v320
  %372 = vst.msk [vmem:[%s7 + $0xc] sm:$0xf] %vm368, %v321
  %373 = vst.msk [vmem:[%s7 + $0x10] sm:$0xf] %vm368, %v322
  %374 = vst.msk [vmem:[%s7 + $0x14] sm:$0xf] %vm368, %v323
  %375 = vst.msk [vmem:[%s7 + $0x18] sm:$0xf] %vm368, %v324
  %376 = vst.msk [vmem:[%s7 + $0x1c] sm:$0xf] %vm368, %v325
  %377 = vst.msk [vmem:[%s7 + $0x20] sm:$0xf] %vm368, %v326
  %378 = vst.msk [vmem:[%s7 + $0x24] sm:$0xf] %vm368, %v327
  %379 = vst.msk [vmem:[%s7 + $0x28] sm:$0xf] %vm368, %v328
  %380 = vst.msk [vmem:[%s7 + $0x2c] sm:$0xf] %vm368, %v329
  %381 = vst.msk [vmem:[%s7 + $0x30] sm:$0xf] %vm368, %v330
  %382 = vst.msk [vmem:[%s7 + $0x34] sm:$0xf] %vm368, %v331
  %383 = vst.msk [vmem:[%s7 + $0x38] sm:$0xf] %vm368, %v332
  %384 = vst.msk [vmem:[%s7 + $0x3c] sm:$0xf] %vm368, %v333
  %385 = vst.msk [vmem:[%s7 + $0x40] sm:$0xf] %vm368, %v334
  %386 = vst.msk [vmem:[%s7 + $0x44] sm:$0xf] %vm368, %v335
  %387 = vst.msk [vmem:[%s7 + $0x48] sm:$0xf] %vm368, %v336
  %388 = vst.msk [vmem:[%s7 + $0x4c] sm:$0xf] %vm368, %v337
  %389 = vst.msk [vmem:[%s7 + $0x50] sm:$0xf] %vm368, %v338
  %390 = vst.msk [vmem:[%s7 + $0x54] sm:$0xf] %vm368, %v339
  %391 = vst.msk [vmem:[%s7 + $0x58] sm:$0xf] %vm368, %v340
  %392 = vst.msk [vmem:[%s7 + $0x5c] sm:$0xf] %vm368, %v341
  %393 = vst.msk [vmem:[%s7 + $0x60] sm:$0xf] %vm368, %v342
  %v394 = vld [vmem:[%s2] sm:$0xf]
  %v395 = vld [vmem:[%s2 + $0x4] sm:$0xf]
  %v396 = vld [vmem:[%s2 + $0x8] sm:$0xf]
  %v397 = vld [vmem:[%s2 + $0xc] sm:$0xf]
  %v398 = vld [vmem:[%s5] sm:$0x1]
  %v400 = vlaneseq
  %v401 = vshrl.u32 %v400, 7
  %v402 = vsub.s32 0, %v401
  %v403 = vrot.slane %v398, %v402
  %v409 = vunpack.c.l.b16 %v394
  %v410 = vunpack.c.l.b16 %v395
  %v411 = vunpack.c.l.b16 %v396
  %v412 = vunpack.c.l.b16 %v397
  %v413 = vpack.c.b16 %v410, %v409
  %v414 = vpack.c.b16 %v412, %v411
  %417 = vmatprep.subr.bf16.mxu0 0
  %418 = vmatpush1.bf16.msra.mxu0 %v413
  %419 = vmatprep.subr.bf16.mxu0 0
  %420 = vmatpush1.bf16.msra.mxu0 %v414
  %421 = vmatprep.subr.bf16.mxu0 0
  %422 = vmatpush1.bf16.msra.mxu0 0
  %423 = vmatprep.subr.bf16.mxu0 0
  %424 = vmatpush1.bf16.msra.mxu0 0
  %425 = vmatprep.subr.bf16.mxu0 0
  %426 = vmatpush1.bf16.msra.mxu0 0
  %427 = vmatprep.subr.bf16.mxu0 0
  %428 = vmatpush1.bf16.msra.mxu0 0
  %429 = vmatprep.subr.bf16.mxu0 0
  %430 = vmatpush1.bf16.msra.mxu0 0
  %431 = vmatprep.subr.bf16.mxu0 0
  %432 = vmatpush1.bf16.msra.mxu0 0
  %433 = vmatprep.subr.bf16.mxu0 0
  %434 = vmatpush1.bf16.msra.mxu0 0
  %435 = vmatprep.subr.bf16.mxu0 0
  %436 = vmatpush1.bf16.msra.mxu0 0
  %437 = vmatprep.subr.bf16.mxu0 0
  %438 = vmatpush1.bf16.msra.mxu0 0
  %439 = vmatprep.subr.bf16.mxu0 0
  %440 = vmatpush1.bf16.msra.mxu0 0
  %441 = vmatprep.subr.bf16.mxu0 0
  %442 = vmatpush1.bf16.msra.mxu0 0
  %443 = vmatprep.subr.bf16.mxu0 0
  %444 = vmatpush1.bf16.msra.mxu0 0
  %445 = vmatprep.subr.bf16.mxu0 0
  %446 = vmatpush1.bf16.msra.mxu0 0
  %447 = vmatprep.subr.bf16.mxu0 0
  %448 = vmatpush1.bf16.msra.mxu0 0
  %449 = vmatprep.mubr.bf16.mxu0 0
  %450 = vmatmul.mubr.bf16.gmra.mrb[0].mxu0 %v93
  %v451 = vpop.f32.mrb[0].mxu0
  %v452 = vadd.f32 %v403, %v451
  %v453 = vpop.f32.mrb[0].mxu0
  %v454 = vpop.f32.mrb[0].mxu0
  %v455 = vadd.f32 %v403, %v454
  %v456 = vpop.f32.mrb[0].mxu0
  %457 = vmatprep.mubr.bf16.mxu0 0
  %458 = vmatmul.mubr.bf16.gmra.mrb[0].mxu0 %v96
  %v459 = vpop.f32.mrb[0].mxu0
  %v460 = vadd.f32 %v403, %v459
  %v461 = vpop.f32.mrb[0].mxu0
  %v462 = vpop.f32.mrb[0].mxu0
  %v463 = vadd.f32 %v403, %v462
  %v464 = vpop.f32.mrb[0].mxu0
  %465 = vmatprep.mubr.bf16.mxu0 0
  %466 = vmatmul.mubr.bf16.gmra.mrb[0].mxu0 %v99
  %v467 = vpop.f32.mrb[0].mxu0
  %v468 = vadd.f32 %v403, %v467
  %v469 = vpop.f32.mrb[0].mxu0
  %v470 = vpop.f32.mrb[0].mxu0
  %v471 = vadd.f32 %v403, %v470
  %v472 = vpop.f32.mrb[0].mxu0
  %473 = vmatprep.mubr.bf16.mxu0 0
  %474 = vmatmul.mubr.bf16.gmra.mrb[0].mxu0 %v102
  %v475 = vpop.f32.mrb[0].mxu0
  %v476 = vadd.f32 %v403, %v475
  %v477 = vpop.f32.mrb[0].mxu0
  %v478 = vpop.f32.mrb[0].mxu0
  %v479 = vadd.f32 %v403, %v478
  %v480 = vpop.f32.mrb[0].mxu0
  %481 = vmatprep.mubr.bf16.mxu0 0
  %482 = vmatmul.mubr.bf16.gmra.mrb[0].mxu0 %v105
  %v483 = vpop.f32.mrb[0].mxu0
  %v484 = vadd.f32 %v403, %v483
  %v485 = vpop.f32.mrb[0].mxu0
  %v486 = vpop.f32.mrb[0].mxu0
  %v487 = vadd.f32 %v403, %v486
  %v488 = vpop.f32.mrb[0].mxu0
  %489 = vmatprep.mubr.bf16.mxu0 0
  %490 = vmatmul.mubr.bf16.gmra.mrb[0].mxu0 %v108
  %v491 = vpop.f32.mrb[0].mxu0
  %v492 = vadd.f32 %v403, %v491
  %v493 = vpop.f32.mrb[0].mxu0
  %v494 = vpop.f32.mrb[0].mxu0
  %v495 = vadd.f32 %v403, %v494
  %v496 = vpop.f32.mrb[0].mxu0
  %497 = vmatprep.mubr.bf16.mxu0 0
  %498 = vmatmul.mubr.bf16.gmra.mrb[0].mxu0 %v111
  %v499 = vpop.f32.mrb[0].mxu0
  %v500 = vadd.f32 %v403, %v499
  %v501 = vpop.f32.mrb[0].mxu0
  %v502 = vpop.f32.mrb[0].mxu0
  %v503 = vadd.f32 %v403, %v502
  %v504 = vpop.f32.mrb[0].mxu0
  %505 = vmatprep.mubr.bf16.mxu0 0
  %506 = vmatmul.mubr.bf16.gmra.mrb[0].mxu0 %v114
  %v507 = vpop.f32.mrb[0].mxu0
  %v508 = vadd.f32 %v403, %v507
  %v509 = vpop.f32.mrb[0].mxu0
  %v510 = vpop.f32.mrb[0].mxu0
  %v511 = vadd.f32 %v403, %v510
  %v512 = vpop.f32.mrb[0].mxu0
  %513 = vmatprep.mubr.bf16.mxu0 0
  %514 = vmatmul.mubr.bf16.gmra.mrb[0].mxu0 %v117
  %v515 = vpop.f32.mrb[0].mxu0
  %v516 = vadd.f32 %v403, %v515
  %v517 = vpop.f32.mrb[0].mxu0
  %v518 = vpop.f32.mrb[0].mxu0
  %v519 = vadd.f32 %v403, %v518
  %v520 = vpop.f32.mrb[0].mxu0
  %521 = vmatprep.mubr.bf16.mxu0 0
  %522 = vmatmul.mubr.bf16.gmra.mrb[0].mxu0 %v120
  %v523 = vpop.f32.mrb[0].mxu0
  %v524 = vadd.f32 %v403, %v523
  %v525 = vpop.f32.mrb[0].mxu0
  %v526 = vpop.f32.mrb[0].mxu0
  %v527 = vadd.f32 %v403, %v526
  %v528 = vpop.f32.mrb[0].mxu0
  %529 = vmatprep.mubr.bf16.mxu0 0
  %530 = vmatmul.mubr.bf16.gmra.mrb[0].mxu0 %v123
  %v531 = vpop.f32.mrb[0].mxu0
  %v532 = vadd.f32 %v403, %v531
  %v533 = vpop.f32.mrb[0].mxu0
  %v534 = vpop.f32.mrb[0].mxu0
  %v535 = vadd.f32 %v403, %v534
  %v536 = vpop.f32.mrb[0].mxu0
  %537 = vmatprep.mubr.bf16.mxu0 0
  %538 = vmatmul.mubr.bf16.gmra.mrb[0].mxu0 %v126
  %v539 = vpop.f32.mrb[0].mxu0
  %v540 = vadd.f32 %v403, %v539
  %v541 = vpop.f32.mrb[0].mxu0
  %v542 = vpop.f32.mrb[0].mxu0
  %v543 = vadd.f32 %v403, %v542
  %v544 = vpop.f32.mrb[0].mxu0
  %545 = vmatprep.mubr.bf16.mxu0 0
  %546 = vmatmul.mubr.bf16.gmra.mrb[0].mxu0 %v129
  %v547 = vpop.f32.mrb[0].mxu0
  %v548 = vadd.f32 %v403, %v547
  %v549 = vpop.f32.mrb[0].mxu0
  %v550 = vpop.f32.mrb[0].mxu0
  %v551 = vpop.f32.mrb[0].mxu0
  %552 = vdwg.mxu0
  %v553 = vpack.c.bf16 %v455, %v452
  %v554 = vpack.c.bf16 %v463, %v460
  %v555 = vpack.c.bf16 %v471, %v468
  %v556 = vpack.c.bf16 %v479, %v476
  %v557 = vpack.c.bf16 %v487, %v484
  %v558 = vpack.c.bf16 %v495, %v492
  %v559 = vpack.c.bf16 %v503, %v500
  %v560 = vpack.c.bf16 %v511, %v508
  %v561 = vpack.c.bf16 %v519, %v516
  %v562 = vpack.c.bf16 %v527, %v524
  %v563 = vpack.c.bf16 %v535, %v532
  %v564 = vpack.c.bf16 %v543, %v540
  %v565 = vpack.c.bf16 %v548, %v548
  %v579 = vunpack.c.l.b16 %v553
  %v580 = vunpack.c.h.b16 %v553
  %v581 = vunpack.c.l.b16 %v554
  %v582 = vunpack.c.h.b16 %v554
  %v583 = vunpack.c.l.b16 %v555
  %v584 = vunpack.c.h.b16 %v555
  %v585 = vunpack.c.l.b16 %v556
  %v586 = vunpack.c.h.b16 %v556
  %v587 = vunpack.c.l.b16 %v557
  %v588 = vunpack.c.h.b16 %v557
  %v589 = vunpack.c.l.b16 %v558
  %v590 = vunpack.c.h.b16 %v558
  %v591 = vunpack.c.l.b16 %v559
  %v592 = vunpack.c.h.b16 %v559
  %v593 = vunpack.c.l.b16 %v560
  %v594 = vunpack.c.h.b16 %v560
  %v595 = vunpack.c.l.b16 %v561
  %v596 = vunpack.c.h.b16 %v561
  %v597 = vunpack.c.l.b16 %v562
  %v598 = vunpack.c.h.b16 %v562
  %v599 = vunpack.c.l.b16 %v563
  %v600 = vunpack.c.h.b16 %v563
  %v601 = vunpack.c.l.b16 %v564
  %v602 = vunpack.c.h.b16 %v564
  %v603 = vunpack.c.l.b16 %v565
  %v604 = vpack.c.b16 %v579, %v579
  %v605 = vpack.c.b16 %v580, %v580
  %v606 = vpack.c.b16 %v581, %v581
  %v607 = vpack.c.b16 %v582, %v582
  %v608 = vpack.c.b16 %v583, %v583
  %v609 = vpack.c.b16 %v584, %v584
  %v610 = vpack.c.b16 %v585, %v585
  %v611 = vpack.c.b16 %v586, %v586
  %v612 = vpack.c.b16 %v587, %v587
  %v613 = vpack.c.b16 %v588, %v588
  %v614 = vpack.c.b16 %v589, %v589
  %v615 = vpack.c.b16 %v590, %v590
  %v616 = vpack.c.b16 %v591, %v591
  %v617 = vpack.c.b16 %v592, %v592
  %v618 = vpack.c.b16 %v593, %v593
  %v619 = vpack.c.b16 %v594, %v594
  %v620 = vpack.c.b16 %v595, %v595
  %v621 = vpack.c.b16 %v596, %v596
  %v622 = vpack.c.b16 %v597, %v597
  %v623 = vpack.c.b16 %v598, %v598
  %v624 = vpack.c.b16 %v599, %v599
  %v625 = vpack.c.b16 %v600, %v600
  %v626 = vpack.c.b16 %v601, %v601
  %v627 = vpack.c.b16 %v602, %v602
  %v628 = vpack.c.b16 %v603, %v603
  %654 = vst.msk [vmem:[%s8] sm:$0xf] %vm368, %v604
  %655 = vst.msk [vmem:[%s8 + $0x4] sm:$0xf] %vm368, %v605
  %656 = vst.msk [vmem:[%s8 + $0x8] sm:$0xf] %vm368, %v606
  %657 = vst.msk [vmem:[%s8 + $0xc] sm:$0xf] %vm368, %v607
  %658 = vst.msk [vmem:[%s8 + $0x10] sm:$0xf] %vm368, %v608
  %659 = vst.msk [vmem:[%s8 + $0x14] sm:$0xf] %vm368, %v609
  %660 = vst.msk [vmem:[%s8 + $0x18] sm:$0xf] %vm368, %v610
  %661 = vst.msk [vmem:[%s8 + $0x1c] sm:$0xf] %vm368, %v611
  %662 = vst.msk [vmem:[%s8 + $0x20] sm:$0xf] %vm368, %v612
  %663 = vst.msk [vmem:[%s8 + $0x24] sm:$0xf] %vm368, %v613
  %664 = vst.msk [vmem:[%s8 + $0x28] sm:$0xf] %vm368, %v614
  %665 = vst.msk [vmem:[%s8 + $0x2c] sm:$0xf] %vm368, %v615
  %666 = vst.msk [vmem:[%s8 + $0x30] sm:$0xf] %vm368, %v616
  %667 = vst.msk [vmem:[%s8 + $0x34] sm:$0xf] %vm368, %v617
  %668 = vst.msk [vmem:[%s8 + $0x38] sm:$0xf] %vm368, %v618
  %669 = vst.msk [vmem:[%s8 + $0x3c] sm:$0xf] %vm368, %v619
  %670 = vst.msk [vmem:[%s8 + $0x40] sm:$0xf] %vm368, %v620
  %671 = vst.msk [vmem:[%s8 + $0x44] sm:$0xf] %vm368, %v621
  %672 = vst.msk [vmem:[%s8 + $0x48] sm:$0xf] %vm368, %v622
  %673 = vst.msk [vmem:[%s8 + $0x4c] sm:$0xf] %vm368, %v623
  %674 = vst.msk [vmem:[%s8 + $0x50] sm:$0xf] %vm368, %v624
  %675 = vst.msk [vmem:[%s8 + $0x54] sm:$0xf] %vm368, %v625
  %676 = vst.msk [vmem:[%s8 + $0x58] sm:$0xf] %vm368, %v626
  %677 = vst.msk [vmem:[%s8 + $0x5c] sm:$0xf] %vm368, %v627
  %678 = vst.msk [vmem:[%s8 + $0x60] sm:$0xf] %vm368, %v628
  %v679 = vld [vmem:[%s3] sm:$0xf]
  %v680 = vld [vmem:[%s3 + $0x4] sm:$0xf]
  %v681 = vld [vmem:[%s3 + $0x8] sm:$0xf]
  %v682 = vld [vmem:[%s3 + $0xc] sm:$0xf]
  %v683 = vld [vmem:[%s6] sm:$0x1]
  %v685 = vlaneseq
  %v686 = vshrl.u32 %v685, 7
  %v687 = vsub.s32 0, %v686
  %v688 = vrot.slane %v683, %v687
  %v694 = vunpack.c.l.b16 %v679
  %v695 = vunpack.c.l.b16 %v680
  %v696 = vunpack.c.l.b16 %v681
  %v697 = vunpack.c.l.b16 %v682
  %v698 = vpack.c.b16 %v695, %v694
  %v699 = vpack.c.b16 %v697, %v696
  %702 = vmatprep.subr.bf16.mxu0 0
  %703 = vmatpush1.bf16.msra.mxu0 %v698
  %704 = vmatprep.subr.bf16.mxu0 0
  %705 = vmatpush1.bf16.msra.mxu0 %v699
  %706 = vmatprep.subr.bf16.mxu0 0
  %707 = vmatpush1.bf16.msra.mxu0 0
  %708 = vmatprep.subr.bf16.mxu0 0
  %709 = vmatpush1.bf16.msra.mxu0 0
  %710 = vmatprep.subr.bf16.mxu0 0
  %711 = vmatpush1.bf16.msra.mxu0 0
  %712 = vmatprep.subr.bf16.mxu0 0
  %713 = vmatpush1.bf16.msra.mxu0 0
  %714 = vmatprep.subr.bf16.mxu0 0
  %715 = vmatpush1.bf16.msra.mxu0 0
  %716 = vmatprep.subr.bf16.mxu0 0
  %717 = vmatpush1.bf16.msra.mxu0 0
  %718 = vmatprep.subr.bf16.mxu0 0
  %719 = vmatpush1.bf16.msra.mxu0 0
  %720 = vmatprep.subr.bf16.mxu0 0
  %721 = vmatpush1.bf16.msra.mxu0 0
  %722 = vmatprep.subr.bf16.mxu0 0
  %723 = vmatpush1.bf16.msra.mxu0 0
  %724 = vmatprep.subr.bf16.mxu0 0
  %725 = vmatpush1.bf16.msra.mxu0 0
  %726 = vmatprep.subr.bf16.mxu0 0
  %727 = vmatpush1.bf16.msra.mxu0 0
  %728 = vmatprep.subr.bf16.mxu0 0
  %729 = vmatpush1.bf16.msra.mxu0 0
  %730 = vmatprep.subr.bf16.mxu0 0
  %731 = vmatpush1.bf16.msra.mxu0 0
  %732 = vmatprep.subr.bf16.mxu0 0
  %733 = vmatpush1.bf16.msra.mxu0 0
  %734 = vmatprep.mubr.bf16.mxu0 0
  %735 = vmatmul.mubr.bf16.gmra.mrb[0].mxu0 %v93
  %v736 = vpop.f32.mrb[0].mxu0
  %v737 = vadd.f32 %v688, %v736
  %v738 = vpop.f32.mrb[0].mxu0
  %v739 = vpop.f32.mrb[0].mxu0
  %v740 = vadd.f32 %v688, %v739
  %v741 = vpop.f32.mrb[0].mxu0
  %742 = vmatprep.mubr.bf16.mxu0 0
  %743 = vmatmul.mubr.bf16.gmra.mrb[0].mxu0 %v96
  %v744 = vpop.f32.mrb[0].mxu0
  %v745 = vadd.f32 %v688, %v744
  %v746 = vpop.f32.mrb[0].mxu0
  %v747 = vpop.f32.mrb[0].mxu0
  %v748 = vadd.f32 %v688, %v747
  %v749 = vpop.f32.mrb[0].mxu0
  %750 = vmatprep.mubr.bf16.mxu0 0
  %751 = vmatmul.mubr.bf16.gmra.mrb[0].mxu0 %v99
  %v752 = vpop.f32.mrb[0].mxu0
  %v753 = vadd.f32 %v688, %v752
  %v754 = vpop.f32.mrb[0].mxu0
  %v755 = vpop.f32.mrb[0].mxu0
  %v756 = vadd.f32 %v688, %v755
  %v757 = vpop.f32.mrb[0].mxu0
  %758 = vmatprep.mubr.bf16.mxu0 0
  %759 = vmatmul.mubr.bf16.gmra.mrb[0].mxu0 %v102
  %v760 = vpop.f32.mrb[0].mxu0
  %v761 = vadd.f32 %v688, %v760
  %v762 = vpop.f32.mrb[0].mxu0
  %v763 = vpop.f32.mrb[0].mxu0
  %v764 = vadd.f32 %v688, %v763
  %v765 = vpop.f32.mrb[0].mxu0
  %766 = vmatprep.mubr.bf16.mxu0 0
  %767 = vmatmul.mubr.bf16.gmra.mrb[0].mxu0 %v105
  %v768 = vpop.f32.mrb[0].mxu0
  %v769 = vadd.f32 %v688, %v768
  %v770 = vpop.f32.mrb[0].mxu0
  %v771 = vpop.f32.mrb[0].mxu0
  %v772 = vadd.f32 %v688, %v771
  %v773 = vpop.f32.mrb[0].mxu0
  %774 = vmatprep.mubr.bf16.mxu0 0
  %775 = vmatmul.mubr.bf16.gmra.mrb[0].mxu0 %v108
  %v776 = vpop.f32.mrb[0].mxu0
  %v777 = vadd.f32 %v688, %v776
  %v778 = vpop.f32.mrb[0].mxu0
  %v779 = vpop.f32.mrb[0].mxu0
  %v780 = vadd.f32 %v688, %v779
  %v781 = vpop.f32.mrb[0].mxu0
  %782 = vmatprep.mubr.bf16.mxu0 0
  %783 = vmatmul.mubr.bf16.gmra.mrb[0].mxu0 %v111
  %v784 = vpop.f32.mrb[0].mxu0
  %v785 = vadd.f32 %v688, %v784
  %v786 = vpop.f32.mrb[0].mxu0
  %v787 = vpop.f32.mrb[0].mxu0
  %v788 = vadd.f32 %v688, %v787
  %v789 = vpop.f32.mrb[0].mxu0
  %790 = vmatprep.mubr.bf16.mxu0 0
  %791 = vmatmul.mubr.bf16.gmra.mrb[0].mxu0 %v114
  %v792 = vpop.f32.mrb[0].mxu0
  %v793 = vadd.f32 %v688, %v792
  %v794 = vpop.f32.mrb[0].mxu0
  %v795 = vpop.f32.mrb[0].mxu0
  %v796 = vadd.f32 %v688, %v795
  %v797 = vpop.f32.mrb[0].mxu0
  %798 = vmatprep.mubr.bf16.mxu0 0
  %799 = vmatmul.mubr.bf16.gmra.mrb[0].mxu0 %v117
  %v800 = vpop.f32.mrb[0].mxu0
  %v801 = vadd.f32 %v688, %v800
  %v802 = vpop.f32.mrb[0].mxu0
  %v803 = vpop.f32.mrb[0].mxu0
  %v804 = vadd.f32 %v688, %v803
  %v805 = vpop.f32.mrb[0].mxu0
  %806 = vmatprep.mubr.bf16.mxu0 0
  %807 = vmatmul.mubr.bf16.gmra.mrb[0].mxu0 %v120
  %v808 = vpop.f32.mrb[0].mxu0
  %v809 = vadd.f32 %v688, %v808
  %v810 = vpop.f32.mrb[0].mxu0
  %v811 = vpop.f32.mrb[0].mxu0
  %v812 = vadd.f32 %v688, %v811
  %v813 = vpop.f32.mrb[0].mxu0
  %814 = vmatprep.mubr.bf16.mxu0 0
  %815 = vmatmul.mubr.bf16.gmra.mrb[0].mxu0 %v123
  %v816 = vpop.f32.mrb[0].mxu0
  %v817 = vadd.f32 %v688, %v816
  %v818 = vpop.f32.mrb[0].mxu0
  %v819 = vpop.f32.mrb[0].mxu0
  %v820 = vadd.f32 %v688, %v819
  %v821 = vpop.f32.mrb[0].mxu0
  %822 = vmatprep.mubr.bf16.mxu0 0
  %823 = vmatmul.mubr.bf16.gmra.mrb[0].mxu0 %v126
  %v824 = vpop.f32.mrb[0].mxu0
  %v825 = vadd.f32 %v688, %v824
  %v826 = vpop.f32.mrb[0].mxu0
  %v827 = vpop.f32.mrb[0].mxu0
  %v828 = vadd.f32 %v688, %v827
  %v829 = vpop.f32.mrb[0].mxu0
  %830 = vmatprep.mubr.bf16.mxu0 0
  %831 = vmatmul.mubr.bf16.gmra.mrb[0].mxu0 %v129
  %v832 = vpop.f32.mrb[0].mxu0
  %v833 = vadd.f32 %v688, %v832
  %v834 = vpop.f32.mrb[0].mxu0
  %v835 = vpop.f32.mrb[0].mxu0
  %v836 = vpop.f32.mrb[0].mxu0
  %837 = vdwg.mxu0
  %v838 = vpack.c.bf16 %v740, %v737
  %v839 = vpack.c.bf16 %v748, %v745
  %v840 = vpack.c.bf16 %v756, %v753
  %v841 = vpack.c.bf16 %v764, %v761
  %v842 = vpack.c.bf16 %v772, %v769
  %v843 = vpack.c.bf16 %v780, %v777
  %v844 = vpack.c.bf16 %v788, %v785
  %v845 = vpack.c.bf16 %v796, %v793
  %v846 = vpack.c.bf16 %v804, %v801
  %v847 = vpack.c.bf16 %v812, %v809
  %v848 = vpack.c.bf16 %v820, %v817
  %v849 = vpack.c.bf16 %v828, %v825
  %v850 = vpack.c.bf16 %v833, %v833
  %v864 = vunpack.c.l.b16 %v838
  %v865 = vunpack.c.h.b16 %v838
  %v866 = vunpack.c.l.b16 %v839
  %v867 = vunpack.c.h.b16 %v839
  %v868 = vunpack.c.l.b16 %v840
  %v869 = vunpack.c.h.b16 %v840
  %v870 = vunpack.c.l.b16 %v841
  %v871 = vunpack.c.h.b16 %v841
  %v872 = vunpack.c.l.b16 %v842
  %v873 = vunpack.c.h.b16 %v842
  %v874 = vunpack.c.l.b16 %v843
  %v875 = vunpack.c.h.b16 %v843
  %v876 = vunpack.c.l.b16 %v844
  %v877 = vunpack.c.h.b16 %v844
  %v878 = vunpack.c.l.b16 %v845
  %v879 = vunpack.c.h.b16 %v845
  %v880 = vunpack.c.l.b16 %v846
  %v881 = vunpack.c.h.b16 %v846
  %v882 = vunpack.c.l.b16 %v847
  %v883 = vunpack.c.h.b16 %v847
  %v884 = vunpack.c.l.b16 %v848
  %v885 = vunpack.c.h.b16 %v848
  %v886 = vunpack.c.l.b16 %v849
  %v887 = vunpack.c.h.b16 %v849
  %v888 = vunpack.c.l.b16 %v850
  %v889 = vpack.c.b16 %v864, %v864
  %v890 = vpack.c.b16 %v865, %v865
  %v891 = vpack.c.b16 %v866, %v866
  %v892 = vpack.c.b16 %v867, %v867
  %v893 = vpack.c.b16 %v868, %v868
  %v894 = vpack.c.b16 %v869, %v869
  %v895 = vpack.c.b16 %v870, %v870
  %v896 = vpack.c.b16 %v871, %v871
  %v897 = vpack.c.b16 %v872, %v872
  %v898 = vpack.c.b16 %v873, %v873
  %v899 = vpack.c.b16 %v874, %v874
  %v900 = vpack.c.b16 %v875, %v875
  %v901 = vpack.c.b16 %v876, %v876
  %v902 = vpack.c.b16 %v877, %v877
  %v903 = vpack.c.b16 %v878, %v878
  %v904 = vpack.c.b16 %v879, %v879
  %v905 = vpack.c.b16 %v880, %v880
  %v906 = vpack.c.b16 %v881, %v881
  %v907 = vpack.c.b16 %v882, %v882
  %v908 = vpack.c.b16 %v883, %v883
  %v909 = vpack.c.b16 %v884, %v884
  %v910 = vpack.c.b16 %v885, %v885
  %v911 = vpack.c.b16 %v886, %v886
  %v912 = vpack.c.b16 %v887, %v887
  %v913 = vpack.c.b16 %v888, %v888
  %939 = vst.msk [vmem:[%s9] sm:$0xf] %vm368, %v889
  %940 = vst.msk [vmem:[%s9 + $0x4] sm:$0xf] %vm368, %v890
  %941 = vst.msk [vmem:[%s9 + $0x8] sm:$0xf] %vm368, %v891
  %942 = vst.msk [vmem:[%s9 + $0xc] sm:$0xf] %vm368, %v892
  %943 = vst.msk [vmem:[%s9 + $0x10] sm:$0xf] %vm368, %v893
  %944 = vst.msk [vmem:[%s9 + $0x14] sm:$0xf] %vm368, %v894
  %945 = vst.msk [vmem:[%s9 + $0x18] sm:$0xf] %vm368, %v895
  %946 = vst.msk [vmem:[%s9 + $0x1c] sm:$0xf] %vm368, %v896
  %947 = vst.msk [vmem:[%s9 + $0x20] sm:$0xf] %vm368, %v897
  %948 = vst.msk [vmem:[%s9 + $0x24] sm:$0xf] %vm368, %v898
  %949 = vst.msk [vmem:[%s9 + $0x28] sm:$0xf] %vm368, %v899
  %950 = vst.msk [vmem:[%s9 + $0x2c] sm:$0xf] %vm368, %v900
  %951 = vst.msk [vmem:[%s9 + $0x30] sm:$0xf] %vm368, %v901
  %952 = vst.msk [vmem:[%s9 + $0x34] sm:$0xf] %vm368, %v902
  %953 = vst.msk [vmem:[%s9 + $0x38] sm:$0xf] %vm368, %v903
  %954 = vst.msk [vmem:[%s9 + $0x3c] sm:$0xf] %vm368, %v904
  %955 = vst.msk [vmem:[%s9 + $0x40] sm:$0xf] %vm368, %v905
  %956 = vst.msk [vmem:[%s9 + $0x44] sm:$0xf] %vm368, %v906
  %957 = vst.msk [vmem:[%s9 + $0x48] sm:$0xf] %vm368, %v907
  %958 = vst.msk [vmem:[%s9 + $0x4c] sm:$0xf] %vm368, %v908
  %959 = vst.msk [vmem:[%s9 + $0x50] sm:$0xf] %vm368, %v909
  %960 = vst.msk [vmem:[%s9 + $0x54] sm:$0xf] %vm368, %v910
  %961 = vst.msk [vmem:[%s9 + $0x58] sm:$0xf] %vm368, %v911
  %962 = vst.msk [vmem:[%s9 + $0x5c] sm:$0xf] %vm368, %v912
  %963 = vst.msk [vmem:[%s9 + $0x60] sm:$0xf] %vm368, %v913
  // Predicated region
  $region30: #{tpu_custom_call.1} parent=0 // pred_check
    _
  $region31: #{tpu_custom_call.1} parent=0 // pred_check_branch
    %965 = sbr.rel (0) target = $region33
  $region32: #{tpu_custom_call.1} parent=0 // pred_region
    _
  $region33: #{tpu_custom_call.1} parent=0 // pred_fallthru
    _
  // Predicated region
  $region34: #{tpu_custom_call.1} parent=0 // pred_check
    _
  $region35: #{tpu_custom_call.1} parent=0 // pred_check_branch
    %967 = sbr.rel (0) target = $region37
  $region36: #{tpu_custom_call.1} parent=0 // pred_region
    _
  $region37: #{tpu_custom_call.1} parent=0 // pred_fallthru
    _
  // Predicated region
  $region38: #{tpu_custom_call.1} parent=0 // pred_check
    _
  $region39: #{tpu_custom_call.1} parent=0 // pred_check_branch
    %969 = sbr.rel (0) target = $region41
  $region40: #{tpu_custom_call.1} parent=0 // pred_region
    _
  $region41: #{tpu_custom_call.1} parent=0 // pred_fallthru
    _
  // Predicated region
  $region42: #{tpu_custom_call.1} parent=0 // pred_check
    _
  $region43: #{tpu_custom_call.1} parent=0 // pred_check_branch
    %971 = sbr.rel (0) target = $region45
  $region44: #{tpu_custom_call.1} parent=0 // pred_region
    _
  $region45: #{tpu_custom_call.1} parent=0 // pred_fallthru
    _
  // Predicated region
  $region46: #{tpu_custom_call.1} parent=0 // pred_check
    _
  $region47: #{tpu_custom_call.1} parent=0 // pred_check_branch
    %973 = sbr.rel (0) target = $region49
  $region48: #{tpu_custom_call.1} parent=0 // pred_region
    _
  $region49: #{tpu_custom_call.1} parent=0 // pred_fallthru
    _
  // Predicated region
  $region50: #{tpu_custom_call.1} parent=0 // pred_check
    _
  $region51: #{tpu_custom_call.1} parent=0 // pred_check_branch
    %975 = sbr.rel (0) target = $region53
  $region52: #{tpu_custom_call.1} parent=0 // pred_region
    _
  $region53: #{tpu_custom_call.1} parent=0 // pred_fallthru
    _

</llo_original>
